<compile_context>
chip_gen: v7x
topology: tpu7x:2x2x1
jax: 0.10.0
libtpu: 0.0.40
codegen_flags: <defaults>
</compile_context>

<pallas_src>
import functools

import jax
import jax.numpy as jnp
import numpy as np
from jax.experimental import pallas as pl
from jax.experimental.pallas import tpu as pltpu


def _pick_hw_tile(K, Co, hw_pad):
    """Largest 128-multiple power-of-two tile that divides hw_pad, keeps the
    double-buffered (bf16 patch + f32 out) tiles under a conservative VMEM
    budget (sized for v7x's 64 MiB/core VMEM), and leaves >= 2 grid steps along
    HW so the patch DMA of tile i+1 overlaps the matmul of tile i."""
    budget = 16 << 20
    t = 128
    while (hw_pad % (t * 2) == 0
           and t * 2 <= hw_pad // 2
           and 2 * (K * (t * 2) * 2 + Co * (t * 2) * 4) <= budget):
        t *= 2
    return min(t, hw_pad)


def _demod_conv_kernel(gamma_ref, w_ref, p_ref, o_ref, wdm_ref, *, eps):
    # gamma_ref: (1, 1, K)   per-batch gamma repeated over the kh*kw taps (f32)
    # w_ref:     (Co, K)     flat base conv weight (f32), resident across the grid
    # p_ref:     (1, K, T)   bf16 im2col patch tile for this (batch, hw-tile)
    # o_ref:     (1, Co, T)  f32 output tile
    # wdm_ref:   (Co, K)     bf16 VMEM scratch: per-batch demodulated weight
    @pl.when(pl.program_id(1) == 0)
    def _():
        # Modulate + demodulate once per batch element (hoisted out of the HW loop).
        wmod = w_ref[...] * (gamma_ref[0] + 1.0)                    # (Co, K), lane-dense
        d = jax.lax.rsqrt(jnp.sum(wmod * wmod, axis=1, keepdims=True) + eps)
        wdm_ref[...] = (wmod * d).astype(wdm_ref.dtype)

    # Hot loop: pure MXU matmul, bf16 x bf16 -> f32 accumulation.
    o_ref[0] = jnp.dot(wdm_ref[...], p_ref[0],
                       preferred_element_type=jnp.float32)


def weight_demodulation_forward(x, y, conv_w, fc_w, fc_b, eps=1e-8):
    """Pallas implementation of WeightDemodulation.forward
    (demod=True, adaptive_bias=False)."""
    B, Ci, H, W = x.shape
    Co, Ci_w, kh, kw = conv_w.shape
    assert Ci_w == Ci
    ph, pw = kh // 2, kw // 2          # 'same' padding, stride 1 (kh != kw safe)
    KK = kh * kw
    K = Ci * KK
    HW = H * W

    # fc_gamma (LinearBlock -> plain linear): tiny GEMM, plain JAX (XLA fuses it).
    gamma = (y.astype(jnp.float32) @ fc_w.astype(jnp.float32).T
             + fc_b.astype(jnp.float32))                              # (B, Ci)

    # Lane-dense prep in the wrapper (no in-kernel reshapes / masked vregs).
    # k = ci*KK + kk ordering matches conv_w.reshape(Co, Ci*kh*kw).
    w2 = conv_w.reshape(Co, K).astype(jnp.float32)                    # (Co, K)
    gammaK = jnp.repeat(gamma, KK, axis=1).reshape(B, 1, K)           # (B, 1, K)

    # im2col patches (B, K, HW), ci-major then (ky, kx); bf16 halves patch HBM traffic.
    # TODO(synk): replace im2col with kh*kw accumulating shifted-view matmuls inside
    # the kernel to cut HBM bytes ~(kh*kw)x at realistic StyleGAN sizes.
    xp = jnp.pad(x, ((0, 0), (0, 0), (ph, ph), (pw, pw)))
    cols = [xp[:, :, dy:dy + H, dx:dx + W] for dy in range(kh) for dx in range(kw)]
    patches = jnp.stack(cols, axis=2).reshape(B, K, HW).astype(jnp.bfloat16)

    # Pad HW up to a lane-dense multiple of 128 and pick the HW tile.
    HW_pad = ((HW + 127) // 128) * 128
    if HW_pad != HW:
        patches = jnp.pad(patches, ((0, 0), (0, 0), (0, HW_pad - HW)))
    hw_tile = _pick_hw_tile(K, Co, HW_pad)
    n_hw = HW_pad // hw_tile

    # Note: if Co is small in production, pad/stack output-channel groups so the
    # matmul M dim is >=128 (here Co == full array dim, so the block is legal).
    out = pl.pallas_call(
        functools.partial(_demod_conv_kernel, eps=eps),
        out_shape=jax.ShapeDtypeStruct((B, Co, HW_pad), jnp.float32),
        grid_spec=pltpu.PrefetchScalarGridSpec(
            num_scalar_prefetch=0,
            grid=(B, n_hw),
            in_specs=[
                pl.BlockSpec((1, 1, K), lambda b, h: (b, 0, 0)),        # gamma (resident over h)
                pl.BlockSpec((Co, K), lambda b, h: (0, 0)),             # base weight (resident)
                pl.BlockSpec((1, K, hw_tile), lambda b, h: (b, 0, h)),  # patch tile
            ],
            out_specs=pl.BlockSpec((1, Co, hw_tile), lambda b, h: (b, 0, h)),
            scratch_shapes=[pltpu.VMEM((Co, K), jnp.bfloat16)],
        ),
        compiler_params=pltpu.CompilerParams(
            # B parallel (megacore shards batches on v7x); HW must be 'arbitrary'
            # because the demodulated-weight scratch carries state across HW tiles.
            dimension_semantics=("parallel", "arbitrary"),
            vmem_limit_bytes=48 * 1024 * 1024,
        ),
    )(gammaK, w2, patches)

    if HW_pad != HW:
        out = out[:, :, :HW]
    return out.reshape(B, Co, H, W)


def ref_forward(x, y, conv_w, fc_w, fc_b, eps=1e-8):
    """Pure-JAX reference mirroring the PyTorch module exactly."""
    B, Ci, H, W = x.shape
    Co, _, kh, kw = conv_w.shape
    gamma = y @ fc_w.T + fc_b                                       # (B, Ci)
    weight = conv_w[None] * (gamma[:, None, :, None, None] + 1.0)   # (B, Co, Ci, kh, kw)
    d = jax.lax.rsqrt(jnp.sum(weight ** 2, axis=(2, 3, 4), keepdims=True) + eps)
    weight = weight * d
    xr = x.reshape(1, B * Ci, H, W)
    wr = weight.reshape(B * Co, Ci, kh, kw)
    out = jax.lax.conv_general_dilated(
        xr, wr, window_strides=(1, 1),
        padding=((kh // 2, kh // 2), (kw // 2, kw // 2)),
        dimension_numbers=("NCHW", "OIHW", "NCHW"),
        feature_group_count=B)
    return out.reshape(B, Co, H, W)


if __name__ == "__main__":
    key = jax.random.PRNGKey(0)
    k1, k2, k3, k4, k5 = jax.random.split(key, 5)

    B, Ci, Co, H, W = 2, 4, 4, 16, 16
    kh = kw = 3
    cond_dims = 8

    x = jax.random.normal(k1, (B, Ci, H, W), jnp.float32)
    y = jax.random.normal(k2, (B, cond_dims), jnp.float32)
    conv_w = jax.random.normal(k3, (Co, Ci, kh, kw), jnp.float32) * 0.2
    fc_w = jax.random.normal(k4, (Ci, cond_dims), jnp.float32) * 0.2  # fc_gamma weight
    fc_b = jax.random.normal(k5, (Ci,), jnp.float32) * 0.1            # fc_gamma bias

    fwd = jax.jit(weight_demodulation_forward)
    out = jax.block_until_ready(fwd(x, y, conv_w, fc_w, fc_b))

    ref = ref_forward(x, y, conv_w, fc_w, fc_b)
    assert out.shape == (B, Co, H, W)
    # bf16 patches / weights with f32 accumulation -> loosen tolerance vs f32 ref.
    np.testing.assert_allclose(np.asarray(out), np.asarray(ref), rtol=2e-2, atol=2e-2)

    # TODO(synk): adaptive_bias=True branch (fc_beta) not implemented (default is False).
    print("KERNEL_OK")
</pallas_src>

<mosaic_0001>
module attributes {stable_mosaic.version = 11 : i64} {
  func.func @_demod_conv_kernel(%arg0: i32, %arg1: i32, %arg2: memref<1x1x36xf32, #tpu.memory_space<vmem>>, %arg3: memref<4x36xf32, #tpu.memory_space<vmem>>, %arg4: memref<1x36x128xbf16, #tpu.memory_space<vmem>>, %arg5: memref<1x4x128xf32, #tpu.memory_space<vmem>>, %arg6: memref<4x36xbf16, #tpu.memory_space<vmem>>) attributes {dimension_semantics = [#tpu.dimension_semantics<parallel>, #tpu.dimension_semantics<arbitrary>], iteration_bounds = array<i64: 2, 2>, scalar_prefetch = 0 : i64, scratch_operands = 1 : i64, tpu.core_type = #tpu.core_type<tc>, window_params = [{transform_indices = @transform_0, window_bounds = array<i64: 1, 1, 36>}, {pipeline_mode = #tpu.pipeline_mode<synchronous>, transform_indices = @transform_1, window_bounds = array<i64: 4, 36>}, {transform_indices = @transform_2, window_bounds = array<i64: 1, 36, 128>}, {transform_indices = @transform_3, window_bounds = array<i64: 1, 4, 128>}]} {
    %c0_i32 = arith.constant 0 : i32
    %0 = arith.cmpi eq, %arg1, %c0_i32 : i32
    %1 = arith.extui %0 : i1 to i32
    %c0_i32_0 = arith.constant 0 : i32
    %2 = arith.cmpi ne, %1, %c0_i32_0 : i32
    scf.if %2 {
      %c0_8 = arith.constant 0 : index
      %c0_9 = arith.constant 0 : index
      %10 = vector.load %arg3[%c0_8, %c0_9] : memref<4x36xf32, #tpu.memory_space<vmem>>, vector<4x36xf32>
      %c0_10 = arith.constant 0 : index
      %c0_11 = arith.constant 0 : index
      %c0_12 = arith.constant 0 : index
      %11 = vector.load %arg2[%c0_10, %c0_11, %c0_12] : memref<1x1x36xf32, #tpu.memory_space<vmem>>, vector<1x1x36xf32>
      %12 = vector.shape_cast %11 : vector<1x1x36xf32> to vector<1x36xf32>
      %cst_13 = arith.constant 1.000000e+00 : f32
      %13 = vector.broadcast %cst_13 : f32 to vector<1x36xf32>
      %14 = arith.addf %12, %13 : vector<1x36xf32>
      %15 = vector.broadcast %14 : vector<1x36xf32> to vector<4x36xf32>
      %16 = arith.mulf %10, %15 : vector<4x36xf32>
      %17 = arith.mulf %16, %16 : vector<4x36xf32>
      %cst_14 = arith.constant dense<0.000000e+00> : vector<4xf32>
      %18 = vector.multi_reduction <add>, %17, %cst_14 [1] : vector<4x36xf32> to vector<4xf32>
      %19 = vector.shape_cast %18 : vector<4xf32> to vector<4x1xf32>
      %cst_15 = arith.constant 9.99999993E-9 : f32
      %20 = vector.broadcast %cst_15 : f32 to vector<4x1xf32>
      %21 = arith.addf %19, %20 : vector<4x1xf32>
      %22 = math.rsqrt %21 : vector<4x1xf32>
      %23 = vector.broadcast %22 : vector<4x1xf32> to vector<4x36xf32>
      %24 = arith.mulf %16, %23 : vector<4x36xf32>
      %25 = arith.truncf %24 : vector<4x36xf32> to vector<4x36xbf16>
      %c0_16 = arith.constant 0 : index
      %c0_17 = arith.constant 0 : index
      %26 = vector.load %arg6[%c0_16, %c0_17] : memref<4x36xbf16, #tpu.memory_space<vmem>>, vector<4x36xbf16>
      tpu.vector_store %arg6[%c0_16, %c0_17], %25 {strides = array<i32>} : memref<4x36xbf16, #tpu.memory_space<vmem>>, vector<4x36xbf16>,
    } else {
    }
    %c0 = arith.constant 0 : index
    %c0_1 = arith.constant 0 : index
    %3 = vector.load %arg6[%c0, %c0_1] : memref<4x36xbf16, #tpu.memory_space<vmem>>, vector<4x36xbf16>
    %c0_2 = arith.constant 0 : index
    %c0_3 = arith.constant 0 : index
    %c0_4 = arith.constant 0 : index
    %4 = vector.load %arg4[%c0_2, %c0_3, %c0_4] : memref<1x36x128xbf16, #tpu.memory_space<vmem>>, vector<1x36x128xbf16>
    %5 = vector.shape_cast %4 : vector<1x36x128xbf16> to vector<36x128xbf16>
    %cst = arith.constant dense<0.000000e+00> : vector<4x128xf32>
    %6 = tpu.matmul %3, %5, %cst {dimension_numbers = #tpu.dot_dimension_numbers<[1], [0], [0], [1], [0, 0, 1, 1], [], []>} : vector<4x36xbf16>, vector<36x128xbf16>, vector<4x128xf32> -> vector<4x128xf32>
    %c0_5 = arith.constant 0 : index
    %c0_6 = arith.constant 0 : index
    %c0_7 = arith.constant 0 : index
    %7 = vector.load %arg5[%c0_5, %c0_6, %c0_7] : memref<1x4x128xf32, #tpu.memory_space<vmem>>, vector<1x4x128xf32>
    %8 = vector.shape_cast %7 : vector<1x4x128xf32> to vector<4x128xf32>
    %9 = vector.shape_cast %6 : vector<4x128xf32> to vector<1x4x128xf32>
    tpu.vector_store %arg5[%c0_5, %c0_6, %c0_7], %9 {strides = array<i32>} : memref<1x4x128xf32, #tpu.memory_space<vmem>>, vector<1x4x128xf32>,
    return
  }
  func.func @transform_0(%arg0: i32, %arg1: i32) -> (i32, i32, i32) {
    %c0_i32 = arith.constant 0 : i32
    %c0_i32_0 = arith.constant 0 : i32
    %c0_i32_1 = arith.constant 0 : i32
    return %arg0, %c0_i32, %c0_i32_0 : i32, i32, i32
  }
  func.func @transform_1(%arg0: i32, %arg1: i32) -> (i32, i32) {
    %c0_i32 = arith.constant 0 : i32
    %c0_i32_0 = arith.constant 0 : i32
    %c0_i32_1 = arith.constant 0 : i32
    return %c0_i32, %c0_i32_0 : i32, i32
  }
  func.func @transform_2(%arg0: i32, %arg1: i32) -> (i32, i32, i32) {
    %c0_i32 = arith.constant 0 : i32
    %c0_i32_0 = arith.constant 0 : i32
    return %arg0, %c0_i32, %arg1 : i32, i32, i32
  }
  func.func @transform_3(%arg0: i32, %arg1: i32) -> (i32, i32, i32) {
    %c0_i32 = arith.constant 0 : i32
    %c0_i32_0 = arith.constant 0 : i32
    return %arg0, %c0_i32, %arg1 : i32, i32, i32
  }
}

</mosaic_0001>

<llo_original>
// kernel: weight_demodulation_forward.1
$region0: #{weight_demodulation_forward.1}
  #allocation0 [shape = 'u32[]', space=smem, size = 0x4, offset = 0x4, fixed_abs, tag = 'smem constant byte address 0x4 - core index']
  #allocation1 [shape = 'u32[144,128]{1,0:T(1,128)}', space=vmem, size = 0x12000, scoped, tag = 'internal scratch']
  #allocation2 [shape = 'bf16[4,36]{1,0:T(4,128)(2,1)}', space=vmem, size = 0x400, scoped, tag = 'scratch operand']
  %s0 = inlined_call_operand.vmem [shape: f32[2,1,36], index: 0, kind: input, shape index: {}]
  %s1 = inlined_call_operand.vmem [shape: f32[4,36], index: 1, kind: input, shape index: {}]
  %s2 = inlined_call_operand.vmem [shape: bf16[2,36,256], index: 2, kind: input, shape index: {}]
  %s3 = inlined_call_operand.vmem [shape: f32[2,4,256], index: 3, kind: output, shape index: {}]
  %s4 = sld [smem:[#allocation0]]
  $region90: #{weight_demodulation_forward.1} parent=0
    _
  %s6 = ssub.s32 1, %s4
  %s7 = scalar_select 0, %s6, %s4
  $region1: #{weight_demodulation_forward.1} parent=0
    #allocation3 [shape = 'u8[20480]{0}', space=vmem, size = 0x5000, scoped, tag = 'input window, operand 2']
    loop: start=0, step=1, limit=6
    $region2: #{weight_demodulation_forward.1} parent=1 // loop_pre_header
      _
    $region3: #{weight_demodulation_forward.1} parent=1 // loop_header
      %s9 = sphi 0, %s13
      %p10 = scmp.ge.s32.totalorder %s9, 6
      %s16 = sphi 0, %s28
      %s17 = sphi 0, %s24
      %s18 = sphi 0, %s16
      %s19 = sphi 0, %s17
      %s20 = sphi 0, %s18
      %s21 = sphi 0, %s19
      %s31 = sphi 0, %s33
      %s34 = sphi 0, %s31
      %s35 = sphi 0, %s34
      %s51 = sphi 0, %s35
      %s55 = sphi 0, %s55
      %s57 = sphi 0, %s55
      %s58 = sphi 0, %s57
      %s72 = sphi 0, %s58
      %s80 = sphi 0, %s82
      %s83 = sphi 0, %s80
      %s84 = sphi 0, %s83
      %s100 = sphi 0, %s84
      %s108 = sphi 0, %s110
      %s111 = sphi 0, %s108
      %s112 = sphi 0, %s111
      %s128 = sphi 0, %s112
    $region4: #{weight_demodulation_forward.1} parent=1 // loop_header_branch
      %12 = sbr.rel (%p10) target = $region8
    $region5: #{weight_demodulation_forward.1} parent=1 // loop_body
      %s14 = ssub.s32 %s9, 1
      %s15 = ssub.s32 %s9, 2
      %s22 = sadd.s32 1, %s17
      %p23 = scmp.ge.s32.totalorder %s22, 2
      %s24 = scalar_select %p23, 0, %s22
      %s25 = sadd.s32 1, %s16
      %s26 = scalar_select %p23, %s25, %s16
      %p27 = scmp.ge.s32.totalorder %s26, 2
      %s28 = scalar_select %p27, 0, %s26
      %s29 = ssub.s32 %s16, %s28
      %p30 = scmp.eq.s32.totalorder %s29, 0
      %s32 = sadd.s32 %s31, 1
      %s33 = scalar_select %p30, %s31, %s32
      %p36 = pneg %p30
      %p37 = scmp.eq.s32.totalorder %s9, 3
      %p38 = por %p36, %p37
      %p39 = scmp.ne.s32.totalorder %s31, %s34
      %p40 = scmp.eq.s32.totalorder %s9, 0
      %p41 = por %p39, %p40
      %p42 = scmp.ne.s32.totalorder %s31, %s34
      %p43 = scmp.eq.s32.totalorder %s14, 3
      %p44 = por %p42, %p43
      %p45 = scmp.ne.s32.totalorder %s34, %s35
      %p46 = scmp.eq.s32.totalorder %s14, 0
      %p47 = por %p45, %p46
      %p48 = scmp.ne.s32.totalorder %s34, %s35
      %p49 = scmp.eq.s32.totalorder %s15, 3
      %p50 = por %p48, %p49
      %p52 = scmp.ne.s32.totalorder %s35, %s51
      %p53 = scmp.eq.s32.totalorder %s15, 0
      %p54 = por %p52, %p53
      %s56 = sadd.s32 %s55, 1
      %p59 = scmp.eq.s32.totalorder %s9, 3
      %p60 = scmp.ne.s32.totalorder %s55, %s57
      %p61 = scmp.eq.s32.totalorder %s9, 0
      %p62 = por %p60, %p61
      %p63 = scmp.ne.s32.totalorder %s55, %s57
      %p64 = scmp.eq.s32.totalorder %s14, 3
      %p65 = por %p63, %p64
      %p66 = scmp.ne.s32.totalorder %s57, %s58
      %p67 = scmp.eq.s32.totalorder %s14, 0
      %p68 = por %p66, %p67
      %p69 = scmp.ne.s32.totalorder %s57, %s58
      %p70 = scmp.eq.s32.totalorder %s15, 3
      %p71 = por %p69, %p70
      %p73 = scmp.ne.s32.totalorder %s58, %s72
      %p74 = scmp.eq.s32.totalorder %s15, 0
      %p75 = por %p73, %p74
      %s76 = ssub.s32 %s16, %s28
      %s77 = ssub.s32 %s17, %s24
      %s78 = sor.u32 %s76, %s77
      %p79 = scmp.eq.s32.totalorder %s78, 0
      %s81 = sadd.s32 %s80, 1
      %s82 = scalar_select %p79, %s80, %s81
      %p85 = pneg %p79
      %p86 = scmp.eq.s32.totalorder %s9, 3
      %p87 = por %p85, %p86
      %p88 = scmp.ne.s32.totalorder %s80, %s83
      %p89 = scmp.eq.s32.totalorder %s9, 0
      %p90 = por %p88, %p89
      %p91 = scmp.ne.s32.totalorder %s80, %s83
      %p92 = scmp.eq.s32.totalorder %s14, 3
      %p93 = por %p91, %p92
      %p94 = scmp.ne.s32.totalorder %s83, %s84
      %p95 = scmp.eq.s32.totalorder %s14, 0
      %p96 = por %p94, %p95
      %p97 = scmp.ne.s32.totalorder %s83, %s84
      %p98 = scmp.eq.s32.totalorder %s15, 3
      %p99 = por %p97, %p98
      %p101 = scmp.ne.s32.totalorder %s84, %s100
      %p102 = scmp.eq.s32.totalorder %s15, 0
      %p103 = por %p101, %p102
      %s104 = ssub.s32 %s16, %s28
      %s105 = ssub.s32 %s17, %s24
      %s106 = sor.u32 %s104, %s105
      %p107 = scmp.eq.s32.totalorder %s106, 0
      %s109 = sadd.s32 %s108, 1
      %s110 = scalar_select %p107, %s108, %s109
      %p113 = pneg %p107
      %p114 = scmp.eq.s32.totalorder %s9, 3
      %p115 = por %p113, %p114
      %p116 = scmp.ne.s32.totalorder %s108, %s111
      %p117 = scmp.eq.s32.totalorder %s9, 0
      %p118 = por %p116, %p117
      %p119 = scmp.ne.s32.totalorder %s108, %s111
      %p120 = scmp.eq.s32.totalorder %s14, 3
      %p121 = por %p119, %p120
      %p122 = scmp.ne.s32.totalorder %s111, %s112
      %p123 = scmp.eq.s32.totalorder %s14, 0
      %p124 = por %p122, %p123
      %p125 = scmp.ne.s32.totalorder %s111, %s112
      %p126 = scmp.eq.s32.totalorder %s15, 3
      %p127 = por %p125, %p126
      %p129 = scmp.ne.s32.totalorder %s112, %s128
      %p130 = scmp.eq.s32.totalorder %s15, 0
      %p131 = por %p129, %p130
      %p132 = scmp.le.s32.totalorder 1, %s9
      %p133 = scmp.lt.s32.totalorder %s9, 5
      %p134 = pnand %p132, %p133
      %p135 = pneg %p134
      // Predicated region
      $region9: #{weight_demodulation_forward.1} parent=5 // pred_check
        _
      $region10: #{weight_demodulation_forward.1} parent=5 // pred_check_branch
        %137 = sbr.rel (%p134) target = $region12
      $region11: #{weight_demodulation_forward.1} parent=5 // pred_region
        %s138 = ssub.s32 %s9, 1
        // Predicated region
        $region13: #{weight_demodulation_forward.1} parent=11 // pred_check
          %p139 = pneg %p68
        $region14: #{weight_demodulation_forward.1} parent=11 // pred_check_branch
          %141 = sbr.rel (%p139) target = $region16
        $region15: #{weight_demodulation_forward.1} parent=11 // pred_region
          _
        $region16: #{weight_demodulation_forward.1} parent=11 // pred_fallthru
          _
      $region12: #{weight_demodulation_forward.1} parent=5 // pred_fallthru
        _
      %p142 = scmp.lt.s32.totalorder %s9, 4
      // Predicated region
      $region17: #{weight_demodulation_forward.1} parent=5 // pred_check
        %p143 = pneg %p142
      $region18: #{weight_demodulation_forward.1} parent=5 // pred_check_branch
        %145 = sbr.rel (%p143) target = $region20
      $region19: #{weight_demodulation_forward.1} parent=5 // pred_region
        // Predicated region
        $region21: #{weight_demodulation_forward.1} parent=19 // pred_check
          %p146 = pneg %p41
        $region22: #{weight_demodulation_forward.1} parent=19 // pred_check_branch
          %148 = sbr.rel (%p146) target = $region24
        $region23: #{weight_demodulation_forward.1} parent=19 // pred_region
          %p149 = scmp.lt.s32.totalorder %s16, 1
          %s150 = scalar_select %p149, %s16, 1
          %s151 = scalar_lea.vmem %s0, %s150
        $region24: #{weight_demodulation_forward.1} parent=19 // pred_fallthru
          _
        // Predicated region
        $region25: #{weight_demodulation_forward.1} parent=19 // pred_check
          %p152 = pneg %p90
        $region26: #{weight_demodulation_forward.1} parent=19 // pred_check_branch
          %154 = sbr.rel (%p152) target = $region28
        $region27: #{weight_demodulation_forward.1} parent=19 // pred_region
          %s155 = sand.u32 %s80, 1
          %s156 = sand.u32 %s80, 1
          %s157 = smul.addr %s156, 20
          %s158 = scalar_lea.vmem [#allocation3], %s157
          %s159 = smul.addr %s16, 10
          %s160 = sadd.s32 %s17, %s159
          %s161 = smul.addr %s160, 4
          %s162 = scalar_lea.vmem %s2, %s161
          // Predicated region
          $region29: #{weight_demodulation_forward.1} parent=27 // pred_check
            _
          $region30: #{weight_demodulation_forward.1} parent=27 // pred_check_branch
            %164 = sbr.rel (0) target = $region32
          $region31: #{weight_demodulation_forward.1} parent=27 // pred_region
            // Predicated region
            $region33: #{weight_demodulation_forward.1} parent=31 // pred_check
              _
            $region34: #{weight_demodulation_forward.1} parent=31 // pred_check_branch
              %166 = sbr.rel target = $region36
            $region35: #{weight_demodulation_forward.1} parent=31 // pred_region
              // Predicated region
              $region48: #{weight_demodulation_forward.1} parent=35 // pred_check
                _
              $region49: #{weight_demodulation_forward.1} parent=35 // pred_check_branch
                %189 = sbr.rel (0) target = $region51
              $region50: #{weight_demodulation_forward.1} parent=35 // pred_region
                loop: start=0, step=1, limit=1
                $region52: #{weight_demodulation_forward.1} parent=50 // loop_pre_header
                  _
                $region53: #{weight_demodulation_forward.1} parent=50 // loop_header
                  %s191 = sphi 0, %s195
                  %p192 = scmp.ge.s32.totalorder %s191, 1
                  %s196 = sphi %s162, %s162
                  %s197 = sphi %s158, %s158
                $region54: #{weight_demodulation_forward.1} parent=50 // loop_header_branch
                  %194 = sbr.rel (%p192) target = $region58
                $region55: #{weight_demodulation_forward.1} parent=50 // loop_body
                  _
                $region56: #{weight_demodulation_forward.1} parent=50 // loop_footer
                  %s195 = sadd.s32 1, %s191
                $region57: #{weight_demodulation_forward.1} parent=50 // loop_footer_branch
                  %190 = sbr.rel target = $region53
                $region58: #{weight_demodulation_forward.1} parent=50 // loop_exit
                  _
                loop: start=0, step=1, limit=1
                $region59: #{weight_demodulation_forward.1} parent=50 // loop_pre_header
                  _
                $region60: #{weight_demodulation_forward.1} parent=50 // loop_header
                  %s200 = sphi 0, %s204
                  %p201 = scmp.ge.s32.totalorder %s200, 1
                  %s205 = sphi %s162, %s162
                  %s206 = sphi %s158, %s158
                $region61: #{weight_demodulation_forward.1} parent=50 // loop_header_branch
                  %203 = sbr.rel (%p201) target = $region65
                $region62: #{weight_demodulation_forward.1} parent=50 // loop_body
                  %v207 = vld [vmem:[%s205] sm:$0xf]
                  %208 = vst [vmem:[%s206] sm:$0xf] %v207
                  %v209 = vld [vmem:[%s205 + $0x8] sm:$0xf]
                  %210 = vst [vmem:[%s206 + $0x4] sm:$0xf] %v209
                  %v211 = vld [vmem:[%s205 + $0x10] sm:$0xf]
                  %212 = vst [vmem:[%s206 + $0x8] sm:$0xf] %v211
                  %v213 = vld [vmem:[%s205 + $0x18] sm:$0xf]
                  %214 = vst [vmem:[%s206 + $0xc] sm:$0xf] %v213
                  %v215 = vld [vmem:[%s205 + $0x20] sm:$0xf]
                  %216 = vst [vmem:[%s206 + $0x10] sm:$0xf] %v215
                $region63: #{weight_demodulation_forward.1} parent=50 // loop_footer
                  %s204 = sadd.s32 1, %s200
                $region64: #{weight_demodulation_forward.1} parent=50 // loop_footer_branch
                  %199 = sbr.rel target = $region60
                $region65: #{weight_demodulation_forward.1} parent=50 // loop_exit
                  _
              $region51: #{weight_demodulation_forward.1} parent=35 // pred_fallthru
                _
            $region36: #{weight_demodulation_forward.1} parent=31 // pred_fallthru
              _
            // Predicated region
            $region37: #{weight_demodulation_forward.1} parent=31 // pred_check
              _
            $region38: #{weight_demodulation_forward.1} parent=31 // pred_check_branch
              %168 = sbr.rel (0) target = $region40
            $region39: #{weight_demodulation_forward.1} parent=31 // pred_region
              loop: start=0, step=1, limit=1
              $region41: #{weight_demodulation_forward.1} parent=39 // loop_pre_header
                _
              $region42: #{weight_demodulation_forward.1} parent=39 // loop_header
                %s171 = sphi 0, %s175
                %p172 = scmp.ge.s32.totalorder %s171, 1
                %s176 = sphi %s162, %s162
                %s177 = sphi %s158, %s158
              $region43: #{weight_demodulation_forward.1} parent=39 // loop_header_branch
                %174 = sbr.rel (%p172) target = $region47
              $region44: #{weight_demodulation_forward.1} parent=39 // loop_body
                %v178 = vld [vmem:[%s176] sm:$0xf]
                %179 = vst [vmem:[%s177] sm:$0xf] %v178
                %v180 = vld [vmem:[%s176 + $0x8] sm:$0xf]
                %181 = vst [vmem:[%s177 + $0x4] sm:$0xf] %v180
                %v182 = vld [vmem:[%s176 + $0x10] sm:$0xf]
                %183 = vst [vmem:[%s177 + $0x8] sm:$0xf] %v182
                %v184 = vld [vmem:[%s176 + $0x18] sm:$0xf]
                %185 = vst [vmem:[%s177 + $0xc] sm:$0xf] %v184
                %v186 = vld [vmem:[%s176 + $0x20] sm:$0xf]
                %187 = vst [vmem:[%s177 + $0x10] sm:$0xf] %v186
              $region45: #{weight_demodulation_forward.1} parent=39 // loop_footer
                %s175 = sadd.s32 1, %s171
              $region46: #{weight_demodulation_forward.1} parent=39 // loop_footer_branch
                %170 = sbr.rel target = $region42
              $region47: #{weight_demodulation_forward.1} parent=39 // loop_exit
                _
            $region40: #{weight_demodulation_forward.1} parent=31 // pred_fallthru
              _
          $region32: #{weight_demodulation_forward.1} parent=27 // pred_fallthru
            _
          %217 = vnop
        $region28: #{weight_demodulation_forward.1} parent=19 // pred_fallthru
          _
      $region20: #{weight_demodulation_forward.1} parent=5 // pred_fallthru
        _
      %p218 = scmp.le.s32.totalorder 1, %s9
      %p219 = scmp.lt.s32.totalorder %s9, 5
      %p220 = pnand %p218, %p219
      %p221 = pneg %p220
      // Predicated region
      $region66: #{weight_demodulation_forward.1} parent=5 // pred_check
        _
      $region67: #{weight_demodulation_forward.1} parent=5 // pred_check_branch
        %223 = sbr.rel (%p220) target = $region69
      $region68: #{weight_demodulation_forward.1} parent=5 // pred_region
        %s224 = ssub.s32 %s9, 1
        %s225 = sand.u32 %s83, 1
        %s226 = sand.u32 %s83, 1
        %s227 = smul.addr %s226, 20
        %s228 = scalar_lea.vmem [#allocation3], %s227
        // Predicated region
        $region70: #{weight_demodulation_forward.1} parent=68 // pred_check
          %p229 = pneg %p96
        $region71: #{weight_demodulation_forward.1} parent=68 // pred_check_branch
          %231 = sbr.rel (%p229) target = $region73
        $region72: #{weight_demodulation_forward.1} parent=68 // pred_region
          _
        $region73: #{weight_demodulation_forward.1} parent=68 // pred_fallthru
          _
        %p232 = scmp.lt.s32.totalorder %s18, 1
        %s233 = scalar_select %p232, %s18, 1
        %s234 = scalar_lea.vmem %s0, %s233
        %p235 = pneg %p47
        %p236 = pneg %p44
        %p237 = pneg %p68
        %p238 = pneg %p65
        %s239 = sand.u32 %s83, 1
        %s240 = sand.u32 %s83, 1
        %s241 = smul.addr %s240, 20
        %s242 = scalar_lea.vmem [#allocation3], %s241
        %p243 = pneg %p96
        %p244 = pneg %p93
        %p245 = pneg %p124
        %p246 = pneg %p121
        %p247 = scmp.lt.s32.totalorder %s18, 1
        %s248 = scalar_select %p247, %s18, 1
        %p249 = scmp.lt.s32.totalorder %s19, 1
        %s250 = scalar_select %p249, %s19, 1
        %s251 = smul.addr %s248, 2
        %s252 = sadd.s32 %s250, %s251
        %s253 = smul.addr %s252, 4
        %s254 = scalar_lea.vmem %s3, %s253
        %p255 = scmp.lt.s32.totalorder %s18, 1
        %s256 = scalar_select %p255, %s18, 1
        %s257 = scalar_lea.vmem %s0, %s256
        %p258 = scmp.lt.s32.totalorder %s18, 1
        %s259 = scalar_select %p258, %s18, 1
        %p260 = scmp.lt.s32.totalorder %s19, 1
        %s261 = scalar_select %p260, %s19, 1
        %s262 = smul.addr %s259, 2
        %s263 = sadd.s32 %s261, %s262
        %s264 = smul.addr %s263, 4
        %s265 = scalar_lea.vmem %s3, %s264
        %p267 = scmp.eq.s32.totalorder %s19, 0
        // Predicated region
        $region74: #{weight_demodulation_forward.1} parent=68 // pred_check
          %p268 = pneg %p267
        $region75: #{weight_demodulation_forward.1} parent=68 // pred_check_branch
          %270 = sbr.rel (%p268) target = $region77
        $region76: #{weight_demodulation_forward.1} parent=68 // pred_region
          %v271 = vld [vmem:[%s1] sm:$0xf]
          %v272 = vld [vmem:[%s257] sm:$0x1]
          %v273 = vadd.f32 %v272, 1.0
          %v275 = vlaneseq
          %v276 = vshrl.u32 %v275, 7
          %v277 = vsub.s32 0, %v276
          %v278 = vrot.slane %v273, %v277
          %v280 = vmul.f32 %v271, %v278
          %v281 = vmul.f32 %v280, %v280
          %vm282 = vcmask 289792
          %v283 = vsel %vm282, %v281, 0.0
          %284 = vadd.xlane.f32.xlu0 %v283
          %v285 = vpop.xlane.xlu0 %284
          %v286 = vadd.f32 %v285, 1e-08
          %v287 = vrsqrt.pop %v286
          %v288 = vmul.f32 %v280, %v287
          %v289 = vpack.c.bf16 %v288, %v288
          %vm290 = vcmask 287744
          %291 = vst.msk [vmem:[#allocation2] sm:$0x3] %vm290, %v289
        $region77: #{weight_demodulation_forward.1} parent=68 // pred_fallthru
          _
        %v292 = vld [vmem:[#allocation2] sm:$0x3]
        %v293 = vld [vmem:[%s228] sm:$0xf]
        %v294 = vld [vmem:[%s228 + $0x4] sm:$0xf]
        %v295 = vld [vmem:[%s228 + $0x8] sm:$0xf]
        %v296 = vld [vmem:[%s228 + $0xc] sm:$0xf]
        %v297 = vld [vmem:[%s228 + $0x10] sm:$0x3]
        %v303 = vunpack.c.l.b16 %v293
        %v304 = vunpack.c.l.b16 %v294
        %v305 = vunpack.c.l.b16 %v295
        %v306 = vunpack.c.l.b16 %v296
        %v307 = vunpack.c.l.b16 %v297
        %v308 = vpack.c.b16 %v304, %v303
        %v309 = vpack.c.b16 %v306, %v305
        %v310 = vpack.c.b16 %v307, %v307
        %vm313 = vcmask 293888
        %v315 = vsel %vm313, %v292, 0
        %vm317 = vcmask 1041408
        %v319 = vsel %vm317, %v310, 0
        %321 = vmatprep.subr.bf16.mxu0 0
        %322 = vmatpush1.bf16.msra.mxu0 %v308
        %323 = vmatprep.subr.bf16.mxu0 0
        %324 = vmatpush1.bf16.msra.mxu0 %v309
        %325 = vmatprep.subr.bf16.mxu0 0
        %326 = vmatpush1.bf16.msra.mxu0 %v319
        %327 = vmatprep.subr.bf16.mxu0 0
        %328 = vmatpush1.bf16.msra.mxu0 0
        %329 = vmatprep.subr.bf16.mxu0 0
        %330 = vmatpush1.bf16.msra.mxu0 0
        %331 = vmatprep.subr.bf16.mxu0 0
        %332 = vmatpush1.bf16.msra.mxu0 0
        %333 = vmatprep.subr.bf16.mxu0 0
        %334 = vmatpush1.bf16.msra.mxu0 0
        %335 = vmatprep.subr.bf16.mxu0 0
        %336 = vmatpush1.bf16.msra.mxu0 0
        %337 = vmatprep.subr.bf16.mxu0 0
        %338 = vmatpush1.bf16.msra.mxu0 0
        %339 = vmatprep.subr.bf16.mxu0 0
        %340 = vmatpush1.bf16.msra.mxu0 0
        %341 = vmatprep.subr.bf16.mxu0 0
        %342 = vmatpush1.bf16.msra.mxu0 0
        %343 = vmatprep.subr.bf16.mxu0 0
        %344 = vmatpush1.bf16.msra.mxu0 0
        %345 = vmatprep.subr.bf16.mxu0 0
        %346 = vmatpush1.bf16.msra.mxu0 0
        %347 = vmatprep.subr.bf16.mxu0 0
        %348 = vmatpush1.bf16.msra.mxu0 0
        %349 = vmatprep.subr.bf16.mxu0 0
        %350 = vmatpush1.bf16.msra.mxu0 0
        %351 = vmatprep.subr.bf16.mxu0 0
        %352 = vmatpush1.bf16.msra.mxu0 0
        %353 = vmatprep.mubr.bf16.mxu0 0
        %354 = vmatmul.mubr.bf16.gmra.mrb[0].mxu0 %v315
        %v355 = vpop.f32.mrb[0].mxu0
        %v356 = vadd.f32 0.0, %v355
        %v357 = vpop.f32.mrb[0].mxu0
        %v358 = vpop.f32.mrb[0].mxu0
        %v359 = vpop.f32.mrb[0].mxu0
        %360 = vdwg.mxu0
        %361 = vst [vmem:[%s265] sm:$0xf] %v356
        %p362 = scmp.lt.s32.totalorder %s18, 1
        %s363 = scalar_select %p362, %s18, 1
        %p364 = scmp.lt.s32.totalorder %s19, 1
        %s365 = scalar_select %p364, %s19, 1
        %s366 = smul.addr %s363, 2
        %s367 = sadd.s32 %s365, %s366
        %s368 = smul.addr %s367, 4
        %s369 = scalar_lea.vmem %s3, %s368
        // Predicated region
        $region78: #{weight_demodulation_forward.1} parent=68 // pred_check
          %p370 = pneg %p121
        $region79: #{weight_demodulation_forward.1} parent=68 // pred_check_branch
          %372 = sbr.rel (%p370) target = $region81
        $region80: #{weight_demodulation_forward.1} parent=68 // pred_region
          _
        $region81: #{weight_demodulation_forward.1} parent=68 // pred_fallthru
          _
      $region69: #{weight_demodulation_forward.1} parent=5 // pred_fallthru
        _
      %p373 = scmp.le.s32.totalorder 2, %s9
      // Predicated region
      $region82: #{weight_demodulation_forward.1} parent=5 // pred_check
        %p374 = pneg %p373
      $region83: #{weight_demodulation_forward.1} parent=5 // pred_check_branch
        %376 = sbr.rel (%p374) target = $region85
      $region84: #{weight_demodulation_forward.1} parent=5 // pred_region
        %s377 = ssub.s32 %s9, 2
        // Predicated region
        $region86: #{weight_demodulation_forward.1} parent=84 // pred_check
          %p378 = pneg %p127
        $region87: #{weight_demodulation_forward.1} parent=84 // pred_check_branch
          %380 = sbr.rel (%p378) target = $region89
        $region88: #{weight_demodulation_forward.1} parent=84 // pred_region
          %p381 = scmp.lt.s32.totalorder %s20, 1
          %s382 = scalar_select %p381, %s20, 1
          %p383 = scmp.lt.s32.totalorder %s21, 1
          %s384 = scalar_select %p383, %s21, 1
          %s385 = smul.addr %s382, 2
          %s386 = sadd.s32 %s384, %s385
          %s387 = smul.addr %s386, 4
          %s388 = scalar_lea.vmem %s3, %s387
        $region89: #{weight_demodulation_forward.1} parent=84 // pred_fallthru
          _
      $region85: #{weight_demodulation_forward.1} parent=5 // pred_fallthru
        _
    $region6: #{weight_demodulation_forward.1} parent=1 // loop_footer
      %s13 = sadd.s32 1, %s9
    $region7: #{weight_demodulation_forward.1} parent=1 // loop_footer_branch
      %8 = sbr.rel target = $region3
    $region8: #{weight_demodulation_forward.1} parent=1 // loop_exit
      _

</llo_original>
